<compile_context>
chip_gen: v7x
topology: tpu7x:2x2x1
jax: 0.10.0
libtpu: 0.0.40
codegen_flags: <defaults>
</compile_context>

<pallas_src>
import math

import jax
import jax.numpy as jnp
from jax.experimental import pallas as pl
from jax.experimental.pallas import tpu as pltpu

# Module hyper-parameters (AdaFace.__init__ defaults)
MARGIN = 0.4
H = 0.333
S = 64.0
T_ALPHA = 1.0
EPS = 1e-3

# Scoped-VMEM budget for the tiled margin kernel.  With TB=256 / TC=4096 the
# pipelined buffers are ~16-17 MiB; 32 MiB clears v5e's 16 MiB scoped default
# and is safe on every generation (<= v7x's 64 MiB physical VMEM per TC).
VMEM_LIMIT_BYTES = 32 * 1024 * 1024


def _acos(x):
    """float32 arccos for x in (-1, 1), fdlibm-style rational approximation (~1-2 ulp).

    Built only from ops with guaranteed Mosaic lowerings (mul/add/div/sqrt/abs/where).
    Only applied to (TB, 1) vectors, so its cost is negligible.
    # TODO(synk): switch to jnp.arccos once lax.acos_p lowering is guaranteed on Mosaic.
    """
    pS0 = 1.6666586697e-01
    pS1 = -4.2743422091e-02
    pS2 = -8.6563630030e-03
    qS1 = -7.0662963390e-01
    pio2 = 1.5707963267948966

    def _r(z):
        return z * (pS0 + z * (pS1 + z * pS2)) / (1.0 + z * qS1)

    ax = jnp.abs(x)
    # |x| < 0.5 :  acos(x) = pi/2 - (x + x*R(x^2))
    acos_small = pio2 - (x + x * _r(x * x))
    # |x| >= 0.5:  acos(|x|) = 2*asin(sqrt((1-|x|)/2)),  acos(-|x|) = pi - acos(|x|)
    z = (1.0 - ax) * 0.5
    s = jnp.sqrt(z)
    acos_abs = 2.0 * (s + s * _r(z))
    acos_big = jnp.where(x < 0.0, math.pi - acos_abs, acos_abs)
    return jnp.where(ax < 0.5, acos_small, acos_big)


# --------------------------------------------------------------------------
# Kernel 1: batch feature-norm statistics (one small block, runs once).
# NOTE: matches torch (count==0 / count==1 produce NaN mean/std, like torch.std
# on an empty / singleton selection).
# --------------------------------------------------------------------------
def adaface_stats_kernel(emb_ref, labels_ref, bmean_ref, bstd_ref,
                         ms_ref, new_mean_ref, new_std_ref):
    emb = emb_ref[...]                   # (B, D) f32
    labels = labels_ref[...]             # (B, 1) i32

    valid = labels != -1                 # == torch.where(labels != -1)
    validf = valid.astype(jnp.float32)

    norms = jnp.sqrt(jnp.sum(emb * emb, axis=1, keepdims=True))          # (B, 1)
    safe_norms = jnp.clip(norms, 0.001, 100.0)                           # (B, 1)

    count = jnp.sum(validf, axis=0, keepdims=True)                       # (1, 1)
    mean = jnp.sum(safe_norms * validf, axis=0, keepdims=True) / count   # (1, 1)
    diff = (safe_norms - mean) * validf                                  # (B, 1)
    # torch.std default: unbiased (ddof = 1)
    std = jnp.sqrt(jnp.sum(diff * diff, axis=0, keepdims=True) / (count - 1.0))

    new_mean = mean * T_ALPHA + (1.0 - T_ALPHA) * bmean_ref[...]         # (1, 1)
    new_std = std * T_ALPHA + (1.0 - T_ALPHA) * bstd_ref[...]            # (1, 1)
    new_mean_ref[...] = new_mean
    new_std_ref[...] = new_std

    margin_scaler = (safe_norms - new_mean) / (new_std + EPS)            # (B, 1)
    ms_ref[...] = jnp.clip(margin_scaler * H, -1.0, 1.0)


# --------------------------------------------------------------------------
# Kernel 2: tiled (B, C) margin application.  Per-tile work is a clip, one
# (TB, TC) compare against a lane iota, a masked lane-reduce, a tiny (TB, 1)
# acos/cos chain, and a single select + scale.
# --------------------------------------------------------------------------
def adaface_margin_kernel(logits_ref, labels_ref, ms_ref, out_ref):
    TB, TC = out_ref.shape
    cosine = jnp.clip(logits_ref[...], -1.0 + EPS, 1.0 - EPS)            # (TB, TC)
    ms = ms_ref[...]                                                     # (TB, 1)

    # Shift the label into this tile's local column space.  Ignored rows
    # (label == -1) and labels belonging to other C tiles map outside [0, TC)
    # and can never match a non-negative column index, so no "& valid" needed.
    local_label = labels_ref[...] - pl.program_id(1) * TC                # (TB, 1)
    col = jax.lax.broadcasted_iota(jnp.int32, (TB, TC), 1)               # (TB, TC)
    target_mask = col == local_label                                     # (TB, TC)

    # Gather the per-row target cosine (0 if the target column is not in this
    # tile; the result is then unused because target_mask is all-false there).
    target_cos = jnp.sum(jnp.where(target_mask, cosine, 0.0),
                         axis=1, keepdims=True)                          # (TB, 1)

    # angular margin: theta_target = acos(target) * (1 + g_angular), g_angular = -m*ms
    theta_t = _acos(target_cos) * (1.0 - MARGIN * ms)                    # (TB, 1)
    theta_t = jnp.clip(theta_t, EPS, math.pi - EPS)
    # additive margin: - (m + m*ms), then scale by s
    target_val = (jnp.cos(theta_t) - (MARGIN + MARGIN * ms)) * S         # (TB, 1)

    # Non-target columns: cos(clip(acos(x), EPS, pi-EPS)) == x because the clip
    # is a no-op for x in [-1+EPS, 1-EPS], so the output is exactly S * cosine.
    out_ref[...] = jnp.where(target_mask, target_val, cosine * S)


def _round_up(x, m):
    return ((x + m - 1) // m) * m


def adaface_forward(logits, labels, embeddings, batch_mean, batch_std,
                    *, tb=256, tc=4096):
    """Returns ((scaled_cosine_m, None), new_batch_mean, new_batch_std)."""
    B, C = logits.shape
    labels2d = labels.reshape(B, 1).astype(jnp.int32)

    # ---- stats kernel: one small VMEM-resident block, runs once ----
    ms, new_mean, new_std = pl.pallas_call(
        adaface_stats_kernel,
        out_shape=(
            jax.ShapeDtypeStruct((B, 1), jnp.float32),   # margin_scaler
            jax.ShapeDtypeStruct((1, 1), jnp.float32),   # new batch_mean
            jax.ShapeDtypeStruct((1, 1), jnp.float32),   # new batch_std
        ),
        in_specs=[
            pl.BlockSpec(memory_space=pltpu.MemorySpace.VMEM),  # embeddings
            pl.BlockSpec(memory_space=pltpu.MemorySpace.VMEM),  # labels (B,1) int32
            pl.BlockSpec(memory_space=pltpu.MemorySpace.VMEM),  # batch_mean buffer
            pl.BlockSpec(memory_space=pltpu.MemorySpace.VMEM),  # batch_std buffer
        ],
        out_specs=(
            pl.BlockSpec(memory_space=pltpu.MemorySpace.VMEM),
            pl.BlockSpec(memory_space=pltpu.MemorySpace.VMEM),
            pl.BlockSpec(memory_space=pltpu.MemorySpace.VMEM),
        ),
    )(embeddings, labels2d, batch_mean, batch_std)

    # ---- tiled margin kernel over (B, C) ----
    TB = min(tb, _round_up(B, 8))
    TC = min(tc, _round_up(C, 128))
    grid = (pl.cdiv(B, TB), pl.cdiv(C, TC))

    out = pl.pallas_call(
        adaface_margin_kernel,
        out_shape=jax.ShapeDtypeStruct((B, C), jnp.float32),
        grid_spec=pltpu.PrefetchScalarGridSpec(
            num_scalar_prefetch=0,
            grid=grid,
            in_specs=[
                pl.BlockSpec((TB, TC), lambda i, j: (i, j)),   # logits tile
                pl.BlockSpec((TB, 1), lambda i, j: (i, 0)),    # labels rows (resident in j)
                pl.BlockSpec((TB, 1), lambda i, j: (i, 0)),    # margin_scaler rows
            ],
            out_specs=pl.BlockSpec((TB, TC), lambda i, j: (i, j)),
        ),
        # Output reuses the logits HBM buffer (no second B*C*4-byte allocation;
        # becomes a true in-place update when the caller donates logits).
        input_output_aliases={0: 0},
        compiler_params=pltpu.CompilerParams(
            dimension_semantics=("parallel", "parallel"),
            vmem_limit_bytes=VMEM_LIMIT_BYTES),
    )(logits, labels2d, ms)

    # torch returns (scaled_cosine_m, None); buffers are updated in-place there,
    # here we return them functionally (reshaped to the torch buffer shape (1,)).
    return (out, None), new_mean.reshape(1), new_std.reshape(1)


def adaface_ref(logits, labels, embeddings, batch_mean, batch_std):
    """Pure-JAX reference mirroring the torch forward (masked instead of indexed)."""
    B, C = logits.shape
    valid = labels != -1
    vf = valid.astype(jnp.float32)[:, None]
    cosine = jnp.clip(logits, -1.0 + EPS, 1.0 - EPS)
    norms = jnp.sqrt(jnp.sum(embeddings * embeddings, axis=1, keepdims=True))
    safe = jnp.clip(norms, 0.001, 100.0)
    count = vf.sum()
    mean = (safe * vf).sum() / count
    std = jnp.sqrt((((safe - mean) * vf) ** 2).sum() / (count - 1.0))
    new_mean = mean * T_ALPHA + (1.0 - T_ALPHA) * batch_mean.reshape(())
    new_std = std * T_ALPHA + (1.0 - T_ALPHA) * batch_std.reshape(())
    ms = jnp.clip((safe - new_mean) / (new_std + EPS) * H, -1.0, 1.0)
    theta = jnp.arccos(cosine)
    col = jnp.arange(C, dtype=jnp.int32)[None, :]
    tmask = (col == labels[:, None]) & valid[:, None]
    theta = jnp.where(tmask, theta * (1.0 - MARGIN * ms), theta)
    theta_m = jnp.clip(theta, EPS, math.pi - EPS)
    cosm = jnp.cos(theta_m)
    cosm = jnp.where(tmask, cosm - (MARGIN + MARGIN * ms), cosm)
    return cosm * S, new_mean, new_std


if __name__ == "__main__":
    B, C, D = 8, 4096, 32  # batch, num classes, embedding dim

    key = jax.random.PRNGKey(0)
    k1, k2 = jax.random.split(key)
    embeddings = jax.random.normal(k1, (B, D), jnp.float32) * 2.0
    # cosine-similarity-like logits in (-1, 1)
    logits = jnp.tanh(jax.random.normal(k2, (B, C), jnp.float32))
    # labels spread across several C tiles; -1 == ignored row
    labels = jnp.array([3, 1029, -1, 3500, 0, 2047, 2048, 4095], dtype=jnp.int32)

    # buffers from AdaFace.__init__ (t is unused in forward)
    batch_mean = jnp.full((1, 1), 20.0, jnp.float32)
    batch_std = jnp.full((1, 1), 100.0, jnp.float32)

    # reference computed first (logits is aliased into the kernel output)
    ref_out, ref_mean, ref_std = adaface_ref(
        logits, labels, embeddings, batch_mean, batch_std)

    # use tc=1024 here so the small example actually exercises the C tiling (grid (1, 4))
    (scaled, _), new_mean, new_std = adaface_forward(
        logits, labels, embeddings, batch_mean, batch_std, tc=1024)
    jax.block_until_ready(scaled)

    assert jnp.allclose(scaled, ref_out, atol=1e-3), float(
        jnp.max(jnp.abs(scaled - ref_out)))
    assert jnp.allclose(new_mean, ref_mean, atol=1e-4)
    assert jnp.allclose(new_std, ref_std, atol=1e-4)

    print("KERNEL_OK")
</pallas_src>

<mosaic_0001>
module attributes {stable_mosaic.version = 11 : i64} {
  func.func @adaface_stats_kernel(%arg0: memref<8x32xf32, #tpu.memory_space<vmem>>, %arg1: memref<8x1xi32, #tpu.memory_space<vmem>>, %arg2: memref<1x1xf32, #tpu.memory_space<vmem>>, %arg3: memref<1x1xf32, #tpu.memory_space<vmem>>, %arg4: memref<8x1xf32, #tpu.memory_space<vmem>>, %arg5: memref<1x1xf32, #tpu.memory_space<vmem>>, %arg6: memref<1x1xf32, #tpu.memory_space<vmem>>) attributes {dimension_semantics = [], scalar_prefetch = 0 : i64, scratch_operands = 0 : i64, tpu.core_type = #tpu.core_type<tc>} {
    %c0 = arith.constant 0 : index
    %c0_0 = arith.constant 0 : index
    %0 = vector.load %arg0[%c0, %c0_0] : memref<8x32xf32, #tpu.memory_space<vmem>>, vector<8x32xf32>
    %c0_1 = arith.constant 0 : index
    %c0_2 = arith.constant 0 : index
    %1 = vector.load %arg1[%c0_1, %c0_2] : memref<8x1xi32, #tpu.memory_space<vmem>>, vector<8x1xi32>
    %c-1_i32 = arith.constant -1 : i32
    %2 = vector.broadcast %c-1_i32 : i32 to vector<8x1xi32>
    %3 = arith.cmpi ne, %1, %2 : vector<8x1xi32>
    %4 = arith.extui %3 : vector<8x1xi1> to vector<8x1xi32>
    %5 = arith.sitofp %4 : vector<8x1xi32> to vector<8x1xf32>
    %6 = arith.mulf %0, %0 : vector<8x32xf32>
    %cst = arith.constant dense<0.000000e+00> : vector<8xf32>
    %7 = vector.multi_reduction <add>, %6, %cst [1] : vector<8x32xf32> to vector<8xf32>
    %8 = vector.shape_cast %7 : vector<8xf32> to vector<8x1xf32>
    %9 = math.sqrt %8 : vector<8x1xf32>
    %cst_3 = arith.constant 1.000000e-03 : f32
    %cst_4 = arith.constant 1.000000e+02 : f32
    %10 = vector.broadcast %cst_3 : f32 to vector<8x1xf32>
    %11 = arith.maximumf %10, %9 : vector<8x1xf32>
    %12 = vector.broadcast %cst_4 : f32 to vector<8x1xf32>
    %13 = arith.minimumf %12, %11 : vector<8x1xf32>
    %cst_5 = arith.constant dense<0.000000e+00> : vector<1xf32>
    %14 = vector.multi_reduction <add>, %5, %cst_5 [0] : vector<8x1xf32> to vector<1xf32>
    %15 = vector.shape_cast %14 : vector<1xf32> to vector<1x1xf32>
    %16 = arith.mulf %13, %5 : vector<8x1xf32>
    %cst_6 = arith.constant dense<0.000000e+00> : vector<1xf32>
    %17 = vector.multi_reduction <add>, %16, %cst_6 [0] : vector<8x1xf32> to vector<1xf32>
    %18 = vector.shape_cast %17 : vector<1xf32> to vector<1x1xf32>
    %19 = arith.divf %18, %15 : vector<1x1xf32>
    %20 = vector.broadcast %19 : vector<1x1xf32> to vector<8x1xf32>
    %21 = arith.subf %13, %20 : vector<8x1xf32>
    %22 = arith.mulf %21, %5 : vector<8x1xf32>
    %23 = arith.mulf %22, %22 : vector<8x1xf32>
    %cst_7 = arith.constant dense<0.000000e+00> : vector<1xf32>
    %24 = vector.multi_reduction <add>, %23, %cst_7 [0] : vector<8x1xf32> to vector<1xf32>
    %25 = vector.shape_cast %24 : vector<1xf32> to vector<1x1xf32>
    %cst_8 = arith.constant 1.000000e+00 : f32
    %26 = vector.broadcast %cst_8 : f32 to vector<1x1xf32>
    %27 = arith.subf %15, %26 : vector<1x1xf32>
    %28 = arith.divf %25, %27 : vector<1x1xf32>
    %29 = math.sqrt %28 : vector<1x1xf32>
    %cst_9 = arith.constant 1.000000e+00 : f32
    %30 = vector.broadcast %cst_9 : f32 to vector<1x1xf32>
    %31 = arith.mulf %19, %30 : vector<1x1xf32>
    %c0_10 = arith.constant 0 : index
    %c0_11 = arith.constant 0 : index
    %32 = vector.load %arg2[%c0_10, %c0_11] : memref<1x1xf32, #tpu.memory_space<vmem>>, vector<1x1xf32>
    %cst_12 = arith.constant 0.000000e+00 : f32
    %33 = vector.broadcast %cst_12 : f32 to vector<1x1xf32>
    %34 = arith.mulf %33, %32 : vector<1x1xf32>
    %35 = arith.addf %31, %34 : vector<1x1xf32>
    %cst_13 = arith.constant 1.000000e+00 : f32
    %36 = vector.broadcast %cst_13 : f32 to vector<1x1xf32>
    %37 = arith.mulf %29, %36 : vector<1x1xf32>
    %c0_14 = arith.constant 0 : index
    %c0_15 = arith.constant 0 : index
    %38 = vector.load %arg3[%c0_14, %c0_15] : memref<1x1xf32, #tpu.memory_space<vmem>>, vector<1x1xf32>
    %cst_16 = arith.constant 0.000000e+00 : f32
    %39 = vector.broadcast %cst_16 : f32 to vector<1x1xf32>
    %40 = arith.mulf %39, %38 : vector<1x1xf32>
    %41 = arith.addf %37, %40 : vector<1x1xf32>
    %c0_17 = arith.constant 0 : index
    %c0_18 = arith.constant 0 : index
    %42 = vector.load %arg5[%c0_17, %c0_18] : memref<1x1xf32, #tpu.memory_space<vmem>>, vector<1x1xf32>
    tpu.vector_store %arg5[%c0_17, %c0_18], %35 {strides = array<i32>} : memref<1x1xf32, #tpu.memory_space<vmem>>, vector<1x1xf32>,
    %c0_19 = arith.constant 0 : index
    %c0_20 = arith.constant 0 : index
    %43 = vector.load %arg6[%c0_19, %c0_20] : memref<1x1xf32, #tpu.memory_space<vmem>>, vector<1x1xf32>
    tpu.vector_store %arg6[%c0_19, %c0_20], %41 {strides = array<i32>} : memref<1x1xf32, #tpu.memory_space<vmem>>, vector<1x1xf32>,
    %44 = vector.broadcast %35 : vector<1x1xf32> to vector<8x1xf32>
    %45 = arith.subf %13, %44 : vector<8x1xf32>
    %cst_21 = arith.constant 1.000000e-03 : f32
    %46 = vector.broadcast %cst_21 : f32 to vector<1x1xf32>
    %47 = arith.addf %41, %46 : vector<1x1xf32>
    %48 = vector.broadcast %47 : vector<1x1xf32> to vector<8x1xf32>
    %49 = arith.divf %45, %48 : vector<8x1xf32>
    %cst_22 = arith.constant 3.330000e-01 : f32
    %50 = vector.broadcast %cst_22 : f32 to vector<8x1xf32>
    %51 = arith.mulf %49, %50 : vector<8x1xf32>
    %cst_23 = arith.constant -1.000000e+00 : f32
    %cst_24 = arith.constant 1.000000e+00 : f32
    %52 = vector.broadcast %cst_23 : f32 to vector<8x1xf32>
    %53 = arith.maximumf %52, %51 : vector<8x1xf32>
    %54 = vector.broadcast %cst_24 : f32 to vector<8x1xf32>
    %55 = arith.minimumf %54, %53 : vector<8x1xf32>
    %c0_25 = arith.constant 0 : index
    %c0_26 = arith.constant 0 : index
    %56 = vector.load %arg4[%c0_25, %c0_26] : memref<8x1xf32, #tpu.memory_space<vmem>>, vector<8x1xf32>
    tpu.vector_store %arg4[%c0_25, %c0_26], %55 {strides = array<i32>} : memref<8x1xf32, #tpu.memory_space<vmem>>, vector<8x1xf32>,
    return
  }
}

</mosaic_0001>

<llo_original>
// kernel: tpu_custom_call.1
$region0: #{tpu_custom_call.1}
  #allocation0 [shape = 'u32[]', space=smem, size = 0x4, offset = 0x4, fixed_abs, tag = 'smem constant byte address 0x4 - core index']
  #allocation1 [shape = 'u32[144,128]{1,0:T(1,128)}', space=vmem, size = 0x12000, scoped, tag = 'internal scratch']
  #allocation2 [shape = 'f32[1,1]{1,0:T(1,128)S(1)}', space=vmem, size = 0x200, scoped, tag = 'scoped memory for tpu_custom_call.1']
  #allocation3 [shape = 'f32[1,1]{1,0:T(1,128)S(1)}', space=vmem, size = 0x200, scoped, tag = 'scoped memory for tpu_custom_call.1']
  %s0 = inlined_call_operand.vmem [shape: f32[8,32], index: 0, kind: input, shape index: {}]
  %s1 = inlined_call_operand.vmem [shape: s32[8,1], index: 1, kind: input, shape index: {}]
  %s2 = inlined_call_operand.<no memory space> [shape: f32[1,1], index: 2, kind: input, shape index: {}]
  %s3 = inlined_call_operand.<no memory space> [shape: f32[1,1], index: 3, kind: input, shape index: {}]
  %s4 = inlined_call_operand.vmem [shape: f32[8,1], index: 4, kind: output, shape index: {0}]
  %s5 = inlined_call_operand.hbm [shape: f32[1,1], index: 5, kind: output, shape index: {1}]
  %s6 = inlined_call_operand.hbm [shape: f32[1,1], index: 6, kind: output, shape index: {2}]
  %7 = xla_tuple %s4, %s5, %s6
  %s8 = sld [smem:[#allocation0]]
  $region42: #{tpu_custom_call.1} parent=0
    _
  %s10 = ssub.s32 1, %s8
  %s11 = scalar_select 0, %s10, %s8
  %v12 = vstv %s2
  %13 = vst [vmem:[#allocation2] sm:$0x1] %v12
  %v14 = vstv %s3
  %15 = vst [vmem:[#allocation3] sm:$0x1] %v14
  $region1: #{tpu_custom_call.1} parent=0
    #allocation4 [shape = 'u8[512]{0}', space=vmem, size = 0x400, scoped, tag = 'output window, operand 1, single buffered']
    #allocation5 [shape = 's32[1]{0}', space=sflag, size = 0x4, scoped, tag = 'scoped memory for tpu_custom_call.1']
    #allocation6 [shape = 'u8[512]{0}', space=vmem, size = 0x400, scoped, tag = 'output window, operand 2, single buffered']
    #allocation7 [shape = 's32[1]{0}', space=sflag, size = 0x4, scoped, tag = 'scoped memory for tpu_custom_call.1']
    %16 = vsyncpa [#allocation5], 0
    %17 = vsyncpa [#allocation7], 0
    // Predicated region
    $region2: #{tpu_custom_call.1} parent=1 // pred_check
      _
    $region3: #{tpu_custom_call.1} parent=1 // pred_check_branch
      %19 = sbr.rel (0) target = $region5
    $region4: #{tpu_custom_call.1} parent=1 // pred_region
      _
    $region5: #{tpu_custom_call.1} parent=1 // pred_fallthru
      _
    // Predicated region
    $region6: #{tpu_custom_call.1} parent=1 // pred_check
      _
    $region7: #{tpu_custom_call.1} parent=1 // pred_check_branch
      %21 = sbr.rel (0) target = $region9
    $region8: #{tpu_custom_call.1} parent=1 // pred_region
      _
    $region9: #{tpu_custom_call.1} parent=1 // pred_fallthru
      _
    // Predicated region
    $region10: #{tpu_custom_call.1} parent=1 // pred_check
      _
    $region11: #{tpu_custom_call.1} parent=1 // pred_check_branch
      %23 = sbr.rel (0) target = $region13
    $region12: #{tpu_custom_call.1} parent=1 // pred_region
      _
    $region13: #{tpu_custom_call.1} parent=1 // pred_fallthru
      _
    // Predicated region
    $region14: #{tpu_custom_call.1} parent=1 // pred_check
      _
    $region15: #{tpu_custom_call.1} parent=1 // pred_check_branch
      %25 = sbr.rel (0) target = $region17
    $region16: #{tpu_custom_call.1} parent=1 // pred_region
      _
    $region17: #{tpu_custom_call.1} parent=1 // pred_fallthru
      _
    %v26 = vld [vmem:[%s0] sm:$0xff]
    %v27 = vld [vmem:[%s1] sm:$0xff]
    %vm28 = vcmp.ne.s32.totalorder %v27, 4294967295
    %v29 = vsel %vm28, 1, 0
    %v30 = vcvt.s32.f32 %v29
    %v31 = vmul.f32 %v26, %v26
    %vm32 = vcmask 261120
    %v33 = vsel %vm32, %v31, 0.0
    %34 = vadd.xlane.f32.xlu0 %v33
    %v35 = vpop.xlane.xlu0 %34
    %v36 = vrsqrt.pop %v35
    %v37 = vmul.f32 %v35, %v36
    %vm38 = vcmp.eq.f32.partialorder %v35, inf
    %v39 = vsel %vm38, %v35, %v37
    %vm40 = vcmp.eq.f32.partialorder %v35, 0.0
    %v41 = vand.u32 %v35, 2147483648
    %v42 = vsel %vm40, %v41, %v39
    %v43 = vmax.f32 %v42, 0.001
    %v44 = vmin.f32 %v43, 100.0
    %vm45 = vcmask 7168
    %v46 = vsel %vm45, %v30, 0.0
    %v47 = vrot.slane %v46, 4
    %v48 = vadd.f32 %v46, %v47
    %v49 = vrot.slane %v48, 2
    %v50 = vadd.f32 %v48, %v49
    %v51 = vrot.slane %v50, 1
    %v52 = vadd.f32 %v50, %v51
    %v53 = vmul.f32 %v44, %v30
    %v54 = vsel %vm45, %v53, 0.0
    %v55 = vrot.slane %v54, 4
    %v56 = vadd.f32 %v54, %v55
    %v57 = vrot.slane %v56, 2
    %v58 = vadd.f32 %v56, %v57
    %v59 = vrot.slane %v58, 1
    %v60 = vadd.f32 %v58, %v59
    %v61 = vrcp.pop %v52
    %v62 = vmul.f32 %v60, %v61
    %v63 = vsub.f32 %v44, %v62
    %v64 = vmul.f32 %v63, %v30
    %v65 = vmul.f32 %v64, %v64
    %v66 = vsel %vm45, %v65, 0.0
    %v67 = vrot.slane %v66, 4
    %v68 = vadd.f32 %v66, %v67
    %v69 = vrot.slane %v68, 2
    %v70 = vadd.f32 %v68, %v69
    %v71 = vrot.slane %v70, 1
    %v72 = vadd.f32 %v70, %v71
    %v73 = vsub.f32 %v52, 1.0
    %v74 = vrcp.pop %v73
    %v75 = vmul.f32 %v72, %v74
    %v76 = vrsqrt.pop %v75
    %v77 = vmul.f32 %v75, %v76
    %vm78 = vcmp.eq.f32.partialorder %v75, inf
    %v79 = vsel %vm78, %v75, %v77
    %vm80 = vcmp.eq.f32.partialorder %v75, 0.0
    %v81 = vand.u32 %v75, 2147483648
    %v82 = vsel %vm80, %v81, %v79
    %v83 = vld [vmem:[#allocation2] sm:$0x1]
    %v84 = vmul.f32 %v83, 0.0
    %v85 = vadd.f32 %v62, %v84
    %v86 = vld [vmem:[#allocation3] sm:$0x1]
    %v87 = vmul.f32 %v86, 0.0
    %v88 = vadd.f32 %v82, %v87
    %vm89 = vcmask 0
    %90 = vst.msk [vmem:[#allocation4] sm:$0x1] %vm89, %v85
    %91 = vst.msk [vmem:[#allocation6] sm:$0x1] %vm89, %v88
    %v92 = vlaneseq
    %v93 = vshrl.u32 %v92, 7
    %v94 = vsub.s32 0, %v93
    %v95 = vrot.slane %v85, %v94
    %v96 = vsub.f32 %v44, %v95
    %v97 = vadd.f32 %v88, 0.001
    %v98 = vlaneseq
    %v99 = vshrl.u32 %v98, 7
    %v100 = vsub.s32 0, %v99
    %v101 = vrot.slane %v97, %v100
    %v102 = vrcp.pop %v101
    %v103 = vmul.f32 %v96, %v102
    %v104 = vmul.f32 %v103, 0.333
    %v105 = vmax.f32 %v104, -1.0
    %v106 = vmin.f32 %v105, 1.0
    %107 = vst.msk [vmem:[%s4] sm:$0xff] %vm45, %v106
    // Predicated region
    $region18: #{tpu_custom_call.1} parent=1 // pred_check
      _
    $region19: #{tpu_custom_call.1} parent=1 // pred_check_branch
      %109 = sbr.rel (0) target = $region21
    $region20: #{tpu_custom_call.1} parent=1 // pred_region
      _
    $region21: #{tpu_custom_call.1} parent=1 // pred_fallthru
      _
    // Predicated region
    $region22: #{tpu_custom_call.1} parent=1 // pred_check
      _
    $region23: #{tpu_custom_call.1} parent=1 // pred_check_branch
      %111 = sbr.rel (0) target = $region25
    $region24: #{tpu_custom_call.1} parent=1 // pred_region
      %s113 = ssub.s32 16, 16
      %114 = vsyncadd [#allocation5], %s113
      %s116 = sshll.u32 [#allocation4], 4
      %s117 = int_to_ptr.vmem [resolvable:$true] %s116
      %119 = dma.vmem_to_hbm [thread:$0]  %s117, 16, %s5, [#allocation5]
    $region25: #{tpu_custom_call.1} parent=1 // pred_fallthru
      _
    // Predicated region
    $region26: #{tpu_custom_call.1} parent=1 // pred_check
      _
    $region27: #{tpu_custom_call.1} parent=1 // pred_check_branch
      %121 = sbr.rel (0) target = $region29
    $region28: #{tpu_custom_call.1} parent=1 // pred_region
      %s123 = ssub.s32 16, 16
      %124 = vsyncadd [#allocation7], %s123
      %s126 = sshll.u32 [#allocation6], 4
      %s127 = int_to_ptr.vmem [resolvable:$true] %s126
      %129 = dma.vmem_to_hbm [thread:$0]  %s127, 16, %s6, [#allocation7]
    $region29: #{tpu_custom_call.1} parent=1 // pred_fallthru
      _
    // Predicated region
    $region30: #{tpu_custom_call.1} parent=1 // pred_check
      _
    $region31: #{tpu_custom_call.1} parent=1 // pred_check_branch
      %131 = sbr.rel (0) target = $region33
    $region32: #{tpu_custom_call.1} parent=1 // pred_region
      _
    $region33: #{tpu_custom_call.1} parent=1 // pred_fallthru
      _
    // Predicated region
    $region34: #{tpu_custom_call.1} parent=1 // pred_check
      _
    $region35: #{tpu_custom_call.1} parent=1 // pred_check_branch
      %133 = sbr.rel (0) target = $region37
    $region36: #{tpu_custom_call.1} parent=1 // pred_region
      %134 = dma.done [#allocation5], 16
    $region37: #{tpu_custom_call.1} parent=1 // pred_fallthru
      _
    // Predicated region
    $region38: #{tpu_custom_call.1} parent=1 // pred_check
      _
    $region39: #{tpu_custom_call.1} parent=1 // pred_check_branch
      %136 = sbr.rel (0) target = $region41
    $region40: #{tpu_custom_call.1} parent=1 // pred_region
      %137 = dma.done [#allocation7], 16
    $region41: #{tpu_custom_call.1} parent=1 // pred_fallthru
      _
    %138 = vsyncpa [#allocation5], 1
    %139 = vsyncpa [#allocation7], 1

</llo_original>
